<compile_context>
chip_gen: v6e
topology: v6e:2x2x1
jax: 0.10.0
libtpu: 0.0.40
codegen_flags: <defaults>
</compile_context>

<pallas_src>
import functools

import jax
import jax.numpy as jnp
from jax.experimental import pallas as pl
from jax.experimental.pallas import tpu as pltpu


def _round_up(n, m):
    return ((n + m - 1) // m) * m


def actor_critic_kernel(x_ref, w1_ref, b1_ref, wh_ref, bh_ref, out_ref, *, n_actions):
    # common trunk: Linear(obs, hidden) + ReLU  (bf16 operands, f32 accumulate)
    h = jnp.dot(x_ref[...], w1_ref[...],
                preferred_element_type=jnp.float32) + b1_ref[...]
    h = jnp.maximum(h, 0.0)                                    # (TB, hidden) f32

    # fused heads: single matmul into a lane-dense (TB, HEAD_W) slab
    logits = jnp.dot(h.astype(jnp.bfloat16), wh_ref[...],
                     preferred_element_type=jnp.float32) + bh_ref[...]

    col = jax.lax.broadcasted_iota(jnp.int32, logits.shape, 1)
    is_actor = col < n_actions
    is_critic = col == n_actions

    # softmax over the actor lanes only; padded lanes masked to -inf -> exp()==0
    masked = jnp.where(is_actor, logits, -jnp.inf)
    m = jnp.max(masked, axis=-1, keepdims=True)
    e = jnp.exp(masked - m)
    denom = jnp.sum(e, axis=-1, keepdims=True)
    probs = e * pl.reciprocal(denom, approx=True)

    # lanes [0, n_actions) = actor probs, lane n_actions = critic, rest = 0
    out_ref[...] = jnp.where(is_actor, probs,
                             jnp.where(is_critic, logits, 0.0))


def actor_critic_forward(x, w1_t, b1, wa_t, ba, wc_t, bc, *, block_b=256):
    """x:(B,obs) f32; weights stored transposed vs. PyTorch nn.Linear."""
    B, obs = x.shape
    hidden = w1_t.shape[1]
    n_actions = wa_t.shape[1]
    head_w = _round_up(n_actions + 1, 128)          # fused, lane-dense head width

    # fuse + zero-pad head weights / biases into one (hidden, head_w) matmul
    w_heads = jnp.zeros((hidden, head_w), jnp.float32)
    w_heads = w_heads.at[:, :n_actions].set(wa_t)
    w_heads = w_heads.at[:, n_actions:n_actions + 1].set(wc_t)
    b_heads = jnp.zeros((1, head_w), jnp.float32)
    b_heads = b_heads.at[:, :n_actions].set(ba)
    b_heads = b_heads.at[:, n_actions:n_actions + 1].set(bc)

    # batch tiling: multiple of 8 sublanes, capped at block_b; pad batch to tile
    tb = block_b if B > block_b else _round_up(B, 8)
    b_pad = _round_up(B, tb)
    x_pad = jnp.pad(x, ((0, b_pad - B), (0, 0)))

    # bf16 MXU operands, f32 biases/accumulation
    x_bf = x_pad.astype(jnp.bfloat16)
    w1_bf = w1_t.astype(jnp.bfloat16)
    wh_bf = w_heads.astype(jnp.bfloat16)

    out = pl.pallas_call(
        functools.partial(actor_critic_kernel, n_actions=n_actions),
        out_shape=jax.ShapeDtypeStruct((b_pad, head_w), jnp.float32),
        grid=(b_pad // tb,),
        in_specs=[
            pl.BlockSpec((tb, obs), lambda i: (i, 0)),          # x: batch-tiled
            pl.BlockSpec((obs, hidden), lambda i: (0, 0)),      # trunk weight: resident
            pl.BlockSpec((1, hidden), lambda i: (0, 0)),        # trunk bias
            pl.BlockSpec((hidden, head_w), lambda i: (0, 0)),   # fused head weight
            pl.BlockSpec((1, head_w), lambda i: (0, 0)),        # fused head bias
        ],
        out_specs=pl.BlockSpec((tb, head_w), lambda i: (i, 0)),
        compiler_params=pltpu.CompilerParams(
            dimension_semantics=("parallel",),
            vmem_limit_bytes=32 * 1024 * 1024,
        ),
    )(x_bf, w1_bf, b1, wh_bf, b_heads)

    actor = out[:B, :n_actions]
    critic = out[:B, n_actions:n_actions + 1]
    return actor, critic


def init_params(key, obs_size, n_actions, hidden=128):
    """Deterministic synthetic init (PyTorch-style uniform fan-in bounds)."""
    k1, k2, k3, k4, k5, k6 = jax.random.split(key, 6)

    def uniform(k, shape, fan_in):
        bound = 1.0 / jnp.sqrt(fan_in)
        return jax.random.uniform(k, shape, jnp.float32, -bound, bound)

    # stored already transposed relative to PyTorch nn.Linear weight (out, in)
    w1_t = uniform(k1, (obs_size, hidden), obs_size)
    b1 = uniform(k2, (1, hidden), obs_size)
    wa_t = uniform(k3, (hidden, n_actions), hidden)
    ba = uniform(k4, (1, n_actions), hidden)
    wc_t = uniform(k5, (hidden, 1), hidden)
    bc = uniform(k6, (1, 1), hidden)
    return w1_t, b1, wa_t, ba, wc_t, bc


if __name__ == "__main__":
    obs_size = 16
    n_actions = 4
    batch = 2

    key = jax.random.PRNGKey(0)
    kx, kp = jax.random.split(key)
    x = jax.random.normal(kx, (batch, obs_size), jnp.float32)
    params = init_params(kp, obs_size, n_actions)

    actor, critic = actor_critic_forward(x, *params)
    jax.block_until_ready((actor, critic))

    # reference with the same bf16-operand / f32-accumulate matmuls
    w1_t, b1, wa_t, ba, wc_t, bc = params
    h_ref = jnp.maximum(
        jnp.dot(x.astype(jnp.bfloat16), w1_t.astype(jnp.bfloat16),
                preferred_element_type=jnp.float32) + b1, 0.0)
    h_bf = h_ref.astype(jnp.bfloat16)
    actor_ref = jax.nn.softmax(
        jnp.dot(h_bf, wa_t.astype(jnp.bfloat16),
                preferred_element_type=jnp.float32) + ba, axis=-1)
    critic_ref = jnp.dot(h_bf, wc_t.astype(jnp.bfloat16),
                         preferred_element_type=jnp.float32) + bc

    assert actor.shape == (batch, n_actions) and critic.shape == (batch, 1)
    assert jnp.allclose(actor, actor_ref, atol=5e-3), "actor mismatch"
    assert jnp.allclose(critic, critic_ref, atol=5e-3), "critic mismatch"
    # approx reciprocal -> allow a slightly looser row-sum tolerance
    assert jnp.allclose(jnp.sum(actor, axis=-1), 1.0, atol=5e-3)

    print("KERNEL_OK")
</pallas_src>

<mosaic_0001>
module attributes {stable_mosaic.version = 11 : i64} {
  func.func @actor_critic_kernel(%arg0: i32, %arg1: memref<8x16xbf16, #tpu.memory_space<vmem>>, %arg2: memref<16x128xbf16, #tpu.memory_space<vmem>>, %arg3: memref<1x128xf32, #tpu.memory_space<vmem>>, %arg4: memref<128x128xbf16, #tpu.memory_space<vmem>>, %arg5: memref<1x128xf32, #tpu.memory_space<vmem>>, %arg6: memref<8x128xf32, #tpu.memory_space<vmem>>) attributes {dimension_semantics = [#tpu.dimension_semantics<parallel>], iteration_bounds = array<i64: 1>, scalar_prefetch = 0 : i64, scratch_operands = 0 : i64, tpu.core_type = #tpu.core_type<tc>, window_params = [{transform_indices = @transform_0, window_bounds = array<i64: 8, 16>}, {pipeline_mode = #tpu.pipeline_mode<synchronous>, transform_indices = @transform_1, window_bounds = array<i64: 16, 128>}, {pipeline_mode = #tpu.pipeline_mode<synchronous>, transform_indices = @transform_2, window_bounds = array<i64: 1, 128>}, {pipeline_mode = #tpu.pipeline_mode<synchronous>, transform_indices = @transform_3, window_bounds = array<i64: 128, 128>}, {pipeline_mode = #tpu.pipeline_mode<synchronous>, transform_indices = @transform_4, window_bounds = array<i64: 1, 128>}, {transform_indices = @transform_5, window_bounds = array<i64: 8, 128>}]} {
    %c0 = arith.constant 0 : index
    %c0_0 = arith.constant 0 : index
    %0 = vector.load %arg1[%c0, %c0_0] : memref<8x16xbf16, #tpu.memory_space<vmem>>, vector<8x16xbf16>
    %c0_1 = arith.constant 0 : index
    %c0_2 = arith.constant 0 : index
    %1 = vector.load %arg2[%c0_1, %c0_2] : memref<16x128xbf16, #tpu.memory_space<vmem>>, vector<16x128xbf16>
    %cst = arith.constant dense<0.000000e+00> : vector<8x128xf32>
    %2 = tpu.matmul %0, %1, %cst {dimension_numbers = #tpu.dot_dimension_numbers<[1], [0], [0], [1], [0, 0, 1, 1], [], []>} : vector<8x16xbf16>, vector<16x128xbf16>, vector<8x128xf32> -> vector<8x128xf32>
    %c0_3 = arith.constant 0 : index
    %c0_4 = arith.constant 0 : index
    %3 = vector.load %arg3[%c0_3, %c0_4] : memref<1x128xf32, #tpu.memory_space<vmem>>, vector<1x128xf32>
    %4 = vector.broadcast %3 : vector<1x128xf32> to vector<8x128xf32>
    %5 = arith.addf %2, %4 : vector<8x128xf32>
    %cst_5 = arith.constant 0.000000e+00 : f32
    %6 = vector.broadcast %cst_5 : f32 to vector<8x128xf32>
    %7 = arith.maximumf %5, %6 : vector<8x128xf32>
    %8 = arith.truncf %7 : vector<8x128xf32> to vector<8x128xbf16>
    %c0_6 = arith.constant 0 : index
    %c0_7 = arith.constant 0 : index
    %9 = vector.load %arg4[%c0_6, %c0_7] : memref<128x128xbf16, #tpu.memory_space<vmem>>, vector<128x128xbf16>
    %cst_8 = arith.constant dense<0.000000e+00> : vector<8x128xf32>
    %10 = tpu.matmul %8, %9, %cst_8 {dimension_numbers = #tpu.dot_dimension_numbers<[1], [0], [0], [1], [0, 0, 1, 1], [], []>} : vector<8x128xbf16>, vector<128x128xbf16>, vector<8x128xf32> -> vector<8x128xf32>
    %c0_9 = arith.constant 0 : index
    %c0_10 = arith.constant 0 : index
    %11 = vector.load %arg5[%c0_9, %c0_10] : memref<1x128xf32, #tpu.memory_space<vmem>>, vector<1x128xf32>
    %12 = vector.broadcast %11 : vector<1x128xf32> to vector<8x128xf32>
    %13 = arith.addf %10, %12 : vector<8x128xf32>
    %14 = tpu.iota {dimensions = array<i32: 1>} : vector<8x128xi32>
    %c4_i32 = arith.constant 4 : i32
    %15 = vector.broadcast %c4_i32 : i32 to vector<8x128xi32>
    %16 = arith.cmpi slt, %14, %15 : vector<8x128xi32>
    %c4_i32_11 = arith.constant 4 : i32
    %17 = vector.broadcast %c4_i32_11 : i32 to vector<8x128xi32>
    %18 = arith.cmpi eq, %14, %17 : vector<8x128xi32>
    %cst_12 = arith.constant 0xFF800000 : f32
    %19 = vector.broadcast %cst_12 : f32 to vector<8x128xf32>
    %20 = arith.select %16, %13, %19 : vector<8x128xi1>, vector<8x128xf32>
    %cst_13 = arith.constant dense<0xFF800000> : vector<8xf32>
    %21 = vector.multi_reduction <maximumf>, %20, %cst_13 [1] : vector<8x128xf32> to vector<8xf32>
    %22 = vector.shape_cast %21 : vector<8xf32> to vector<8x1xf32>
    %23 = vector.broadcast %22 : vector<8x1xf32> to vector<8x128xf32>
    %24 = arith.subf %20, %23 : vector<8x128xf32>
    %25 = math.exp %24 : vector<8x128xf32>
    %cst_14 = arith.constant dense<0.000000e+00> : vector<8xf32>
    %26 = vector.multi_reduction <add>, %25, %cst_14 [1] : vector<8x128xf32> to vector<8xf32>
    %27 = vector.shape_cast %26 : vector<8xf32> to vector<8x1xf32>
    %28 = tpu.reciprocal %27 {approx = true} : vector<8x1xf32> -> vector<8x1xf32>
    %29 = vector.broadcast %28 : vector<8x1xf32> to vector<8x128xf32>
    %30 = arith.mulf %25, %29 : vector<8x128xf32>
    %cst_15 = arith.constant 0.000000e+00 : f32
    %31 = vector.broadcast %cst_15 : f32 to vector<8x128xf32>
    %32 = arith.select %18, %13, %31 : vector<8x128xi1>, vector<8x128xf32>
    %33 = arith.select %16, %30, %32 : vector<8x128xi1>, vector<8x128xf32>
    %c0_16 = arith.constant 0 : index
    %c0_17 = arith.constant 0 : index
    %34 = vector.load %arg6[%c0_16, %c0_17] : memref<8x128xf32, #tpu.memory_space<vmem>>, vector<8x128xf32>
    tpu.vector_store %arg6[%c0_16, %c0_17], %33 {strides = array<i32>} : memref<8x128xf32, #tpu.memory_space<vmem>>, vector<8x128xf32>,
    return
  }
  func.func @transform_0(%arg0: i32) -> (i32, i32) {
    %c0_i32 = arith.constant 0 : i32
    %c0_i32_0 = arith.constant 0 : i32
    return %arg0, %c0_i32 : i32, i32
  }
  func.func @transform_1(%arg0: i32) -> (i32, i32) {
    %c0_i32 = arith.constant 0 : i32
    %c0_i32_0 = arith.constant 0 : i32
    %c0_i32_1 = arith.constant 0 : i32
    return %c0_i32, %c0_i32_0 : i32, i32
  }
  func.func @transform_2(%arg0: i32) -> (i32, i32) {
    %c0_i32 = arith.constant 0 : i32
    %c0_i32_0 = arith.constant 0 : i32
    %c0_i32_1 = arith.constant 0 : i32
    return %c0_i32, %c0_i32_0 : i32, i32
  }
  func.func @transform_3(%arg0: i32) -> (i32, i32) {
    %c0_i32 = arith.constant 0 : i32
    %c0_i32_0 = arith.constant 0 : i32
    %c0_i32_1 = arith.constant 0 : i32
    return %c0_i32, %c0_i32_0 : i32, i32
  }
  func.func @transform_4(%arg0: i32) -> (i32, i32) {
    %c0_i32 = arith.constant 0 : i32
    %c0_i32_0 = arith.constant 0 : i32
    %c0_i32_1 = arith.constant 0 : i32
    return %c0_i32, %c0_i32_0 : i32, i32
  }
  func.func @transform_5(%arg0: i32) -> (i32, i32) {
    %c0_i32 = arith.constant 0 : i32
    %c0_i32_0 = arith.constant 0 : i32
    return %arg0, %c0_i32 : i32, i32
  }
}

</mosaic_0001>

<llo_original>
// kernel: tpu_custom_call.1
$region0: #{tpu_custom_call.1}
  #allocation0 [shape = 'u32[]', space=smem, size = 0x4, offset = 0x4, fixed_abs, tag = 'smem constant byte address 0x4 - core index']
  #allocation1 [shape = 'u32[144,128]{1,0:T(1,128)}', space=vmem, size = 0x12000, scoped, tag = 'internal scratch']
  %s0 = inlined_call_operand.hbm [shape: bf16[8,16], index: 0, kind: input, shape index: {}]
  %s1 = inlined_call_operand.hbm [shape: bf16[16,128], index: 1, kind: input, shape index: {}]
  %s2 = inlined_call_operand.vmem [shape: f32[1,128], index: 2, kind: input, shape index: {}]
  %s3 = inlined_call_operand.hbm [shape: bf16[128,128], index: 3, kind: input, shape index: {}]
  %s4 = inlined_call_operand.vmem [shape: f32[1,128], index: 4, kind: input, shape index: {}]
  %s5 = inlined_call_operand.hbm [shape: f32[8,128], index: 5, kind: output, shape index: {}]
  %s6 = sld [smem:[#allocation0]]
  $region42: #{tpu_custom_call.1} parent=0
    _
  %s8 = ssub.s32 1, %s6
  %s9 = scalar_select 0, %s8, %s6
  $region1: #{tpu_custom_call.1} parent=0
    #allocation2 [shape = 'u8[2048]{0}', space=vmem, size = 0x800, scoped, tag = 'input window, operand 0, single buffered']
    #allocation3 [shape = 's32[1]{0}', space=sflag, size = 0x4, scoped, tag = 'scoped memory for tpu_custom_call.1']
    #allocation4 [shape = 's32[1]{0}', space=sflag, size = 0x4, scoped, tag = 'scoped memory for tpu_custom_call.1']
    #allocation5 [shape = 'u8[4096]{0}', space=vmem, size = 0x1000, scoped, tag = 'input window, operand 1, single buffered']
    #allocation6 [shape = 's32[1]{0}', space=sflag, size = 0x4, scoped, tag = 'scoped memory for tpu_custom_call.1']
    #allocation7 [shape = 'u8[32768]{0}', space=vmem, size = 0x8000, scoped, tag = 'input window, operand 3, single buffered']
    #allocation8 [shape = 'u8[4096]{0}', space=vmem, size = 0x1000, scoped, tag = 'output window, operand 0, single buffered']
    %10 = vsyncpa [#allocation3], 0
    %11 = vsyncpa [#allocation6], 0
    %12 = vsyncpa [#allocation4], 0
    // Predicated region
    $region2: #{tpu_custom_call.1} parent=1 // pred_check
      _
    $region3: #{tpu_custom_call.1} parent=1 // pred_check_branch
      %14 = sbr.rel (0) target = $region5
    $region4: #{tpu_custom_call.1} parent=1 // pred_region
      %s16 = ssub.s32 64, 64
      %17 = vsyncadd [#allocation3], %s16
      %s19 = sshll.u32 [#allocation2], 4
      %s20 = int_to_ptr.vmem [resolvable:$true] %s19
      %22 = dma.hbm_to_vmem [thread:$0]  %s0, 64, %s20, [#allocation3]
    $region5: #{tpu_custom_call.1} parent=1 // pred_fallthru
      _
    // Predicated region
    $region6: #{tpu_custom_call.1} parent=1 // pred_check
      _
    $region7: #{tpu_custom_call.1} parent=1 // pred_check_branch
      %24 = sbr.rel (0) target = $region9
    $region8: #{tpu_custom_call.1} parent=1 // pred_region
      %s26 = ssub.s32 128, 128
      %27 = vsyncadd [#allocation6], %s26
      %s28 = sshll.u32 [#allocation5], 4
      %s29 = int_to_ptr.vmem [resolvable:$true] %s28
      %34 = dma.hbm_to_vmem [thread:$0]  %s1, 128, %s29, [#allocation6], 64, 64, 4
    $region9: #{tpu_custom_call.1} parent=1 // pred_fallthru
      _
    // Predicated region
    $region10: #{tpu_custom_call.1} parent=1 // pred_check
      _
    $region11: #{tpu_custom_call.1} parent=1 // pred_check_branch
      %36 = sbr.rel (0) target = $region13
    $region12: #{tpu_custom_call.1} parent=1 // pred_region
      _
    $region13: #{tpu_custom_call.1} parent=1 // pred_fallthru
      _
    // Predicated region
    $region14: #{tpu_custom_call.1} parent=1 // pred_check
      _
    $region15: #{tpu_custom_call.1} parent=1 // pred_check_branch
      %38 = sbr.rel (0) target = $region17
    $region16: #{tpu_custom_call.1} parent=1 // pred_region
      %s40 = ssub.s32 1024, 1024
      %41 = vsyncadd [#allocation6], %s40
      %s42 = sshll.u32 [#allocation7], 4
      %s43 = int_to_ptr.vmem [resolvable:$true] %s42
      %48 = dma.hbm_to_vmem [thread:$0]  %s3, 1024, %s43, [#allocation6], 64, 64, 4
    $region17: #{tpu_custom_call.1} parent=1 // pred_fallthru
      _
    // Predicated region
    $region18: #{tpu_custom_call.1} parent=1 // pred_check
      _
    $region19: #{tpu_custom_call.1} parent=1 // pred_check_branch
      %50 = sbr.rel (0) target = $region21
    $region20: #{tpu_custom_call.1} parent=1 // pred_region
      _
    $region21: #{tpu_custom_call.1} parent=1 // pred_fallthru
      _
    // Predicated region
    $region22: #{tpu_custom_call.1} parent=1 // pred_check
      _
    $region23: #{tpu_custom_call.1} parent=1 // pred_check_branch
      %52 = sbr.rel (0) target = $region25
    $region24: #{tpu_custom_call.1} parent=1 // pred_region
      %53 = dma.done [#allocation3], 64
    $region25: #{tpu_custom_call.1} parent=1 // pred_fallthru
      _
    // Predicated region
    $region26: #{tpu_custom_call.1} parent=1 // pred_check
      _
    $region27: #{tpu_custom_call.1} parent=1 // pred_check_branch
      %55 = sbr.rel (0) target = $region29
    $region28: #{tpu_custom_call.1} parent=1 // pred_region
      %56 = dma.done [#allocation6], 128
    $region29: #{tpu_custom_call.1} parent=1 // pred_fallthru
      _
    // Predicated region
    $region30: #{tpu_custom_call.1} parent=1 // pred_check
      _
    $region31: #{tpu_custom_call.1} parent=1 // pred_check_branch
      %58 = sbr.rel (0) target = $region33
    $region32: #{tpu_custom_call.1} parent=1 // pred_region
      %59 = dma.done [#allocation6], 1024
    $region33: #{tpu_custom_call.1} parent=1 // pred_fallthru
      _
    %v61 = vld [vmem:[#allocation2] sm:$0xf]
    %v62 = vld [vmem:[#allocation5] sm:$0xf]
    %v63 = vld [vmem:[#allocation5 + $0x4] sm:$0xf]
    %v64 = vld [vmem:[%s2] sm:$0x1]
    %v66 = vlaneseq
    %v67 = vshrl.u32 %v66, 7
    %v68 = vsub.s32 0, %v67
    %v69 = vrot.slane %v64, %v68
    %v73 = vunpack.c.l.b16 %v62
    %v74 = vunpack.c.l.b16 %v63
    %v75 = vpack.c.b16 %v74, %v73
    %vm77 = vcmask 130048
    %v79 = vsel %vm77, %v61, 0
    %81 = vmatprep.subr.bf16.mxu0 0
    %82 = vmatpush1.bf16.msra.mxu0 0
    %83 = vmatprep.subr.bf16.mxu0 0
    %84 = vmatpush1.bf16.msra.mxu0 0
    %85 = vmatprep.subr.bf16.mxu0 0
    %86 = vmatpush1.bf16.msra.mxu0 0
    %87 = vmatprep.subr.bf16.mxu0 0
    %88 = vmatpush1.bf16.msra.mxu0 0
    %89 = vmatprep.subr.bf16.mxu0 0
    %90 = vmatpush1.bf16.msra.mxu0 0
    %91 = vmatprep.subr.bf16.mxu0 0
    %92 = vmatpush1.bf16.msra.mxu0 0
    %93 = vmatprep.subr.bf16.mxu0 0
    %94 = vmatpush1.bf16.msra.mxu0 0
    %95 = vmatprep.subr.bf16.mxu0 0
    %96 = vmatpush1.bf16.msra.mxu0 %v75
    %97 = vmatprep.subr.bf16.mxu0 0
    %98 = vmatpush2.bf16.msra.mxu0 0
    %99 = vmatprep.subr.bf16.mxu0 0
    %100 = vmatpush2.bf16.msra.mxu0 0
    %101 = vmatprep.subr.bf16.mxu0 0
    %102 = vmatpush2.bf16.msra.mxu0 0
    %103 = vmatprep.subr.bf16.mxu0 0
    %104 = vmatpush2.bf16.msra.mxu0 0
    %105 = vmatprep.subr.bf16.mxu0 0
    %106 = vmatpush2.bf16.msra.mxu0 0
    %107 = vmatprep.subr.bf16.mxu0 0
    %108 = vmatpush2.bf16.msra.mxu0 0
    %109 = vmatprep.subr.bf16.mxu0 0
    %110 = vmatpush2.bf16.msra.mxu0 0
    %111 = vmatprep.subr.bf16.mxu0 0
    %112 = vmatpush2.bf16.msra.mxu0 0
    %113 = vmatprep.mubr.bf16.mxu0 0
    %114 = vmatmul.mubr.bf16.gmra.mxu0 %v79
    %v115 = vpop.f32.mrf.mxu0
    %v116 = vadd.f32 %v69, %v115
    %v117 = vpop.f32.mrf.mxu0
    %v118 = vpop.f32.mrf.mxu0
    %v119 = vpop.f32.mrf.mxu0
    %120 = vdwg.mxu0
    %v121 = vmax.f32 %v116, 0.0
    %v122 = vpack.c.bf16 %v121, %v121
    %v123 = vld [vmem:[#allocation7] sm:$0xf]
    %v124 = vld [vmem:[#allocation7 + $0x4] sm:$0xf]
    %v125 = vld [vmem:[#allocation7 + $0x8] sm:$0xf]
    %v126 = vld [vmem:[#allocation7 + $0xc] sm:$0xf]
    %v127 = vld [vmem:[#allocation7 + $0x10] sm:$0xf]
    %v128 = vld [vmem:[#allocation7 + $0x14] sm:$0xf]
    %v129 = vld [vmem:[#allocation7 + $0x18] sm:$0xf]
    %v130 = vld [vmem:[#allocation7 + $0x1c] sm:$0xf]
    %v131 = vld [vmem:[#allocation7 + $0x20] sm:$0xf]
    %v132 = vld [vmem:[#allocation7 + $0x24] sm:$0xf]
    %v133 = vld [vmem:[#allocation7 + $0x28] sm:$0xf]
    %v134 = vld [vmem:[#allocation7 + $0x2c] sm:$0xf]
    %v135 = vld [vmem:[#allocation7 + $0x30] sm:$0xf]
    %v136 = vld [vmem:[#allocation7 + $0x34] sm:$0xf]
    %v137 = vld [vmem:[#allocation7 + $0x38] sm:$0xf]
    %v138 = vld [vmem:[#allocation7 + $0x3c] sm:$0xf]
    %v139 = vld [vmem:[%s4] sm:$0x1]
    %v141 = vlaneseq
    %v142 = vshrl.u32 %v141, 7
    %v143 = vsub.s32 0, %v142
    %v144 = vrot.slane %v139, %v143
    %v162 = vunpack.c.l.b16 %v123
    %v163 = vunpack.c.l.b16 %v124
    %v164 = vunpack.c.l.b16 %v125
    %v165 = vunpack.c.l.b16 %v126
    %v166 = vunpack.c.l.b16 %v127
    %v167 = vunpack.c.l.b16 %v128
    %v168 = vunpack.c.l.b16 %v129
    %v169 = vunpack.c.l.b16 %v130
    %v170 = vunpack.c.l.b16 %v131
    %v171 = vunpack.c.l.b16 %v132
    %v172 = vunpack.c.l.b16 %v133
    %v173 = vunpack.c.l.b16 %v134
    %v174 = vunpack.c.l.b16 %v135
    %v175 = vunpack.c.l.b16 %v136
    %v176 = vunpack.c.l.b16 %v137
    %v177 = vunpack.c.l.b16 %v138
    %v178 = vpack.c.b16 %v163, %v162
    %v179 = vpack.c.b16 %v165, %v164
    %v180 = vpack.c.b16 %v167, %v166
    %v181 = vpack.c.b16 %v169, %v168
    %v182 = vpack.c.b16 %v171, %v170
    %v183 = vpack.c.b16 %v173, %v172
    %v184 = vpack.c.b16 %v175, %v174
    %v185 = vpack.c.b16 %v177, %v176
    %194 = vmatprep.subr.bf16.mxu0 0
    %195 = vmatpush1.bf16.msra.mxu0 %v185
    %196 = vmatprep.subr.bf16.mxu0 0
    %197 = vmatpush1.bf16.msra.mxu0 %v184
    %198 = vmatprep.subr.bf16.mxu0 0
    %199 = vmatpush1.bf16.msra.mxu0 %v183
    %200 = vmatprep.subr.bf16.mxu0 0
    %201 = vmatpush1.bf16.msra.mxu0 %v182
    %202 = vmatprep.subr.bf16.mxu0 0
    %203 = vmatpush1.bf16.msra.mxu0 %v181
    %204 = vmatprep.subr.bf16.mxu0 0
    %205 = vmatpush1.bf16.msra.mxu0 %v180
    %206 = vmatprep.subr.bf16.mxu0 0
    %207 = vmatpush1.bf16.msra.mxu0 %v179
    %208 = vmatprep.subr.bf16.mxu0 0
    %209 = vmatpush1.bf16.msra.mxu0 %v178
    %210 = vmatprep.subr.bf16.mxu0 0
    %211 = vmatpush2.bf16.msra.mxu0 0
    %212 = vmatprep.subr.bf16.mxu0 0
    %213 = vmatpush2.bf16.msra.mxu0 0
    %214 = vmatprep.subr.bf16.mxu0 0
    %215 = vmatpush2.bf16.msra.mxu0 0
    %216 = vmatprep.subr.bf16.mxu0 0
    %217 = vmatpush2.bf16.msra.mxu0 0
    %218 = vmatprep.subr.bf16.mxu0 0
    %219 = vmatpush2.bf16.msra.mxu0 0
    %220 = vmatprep.subr.bf16.mxu0 0
    %221 = vmatpush2.bf16.msra.mxu0 0
    %222 = vmatprep.subr.bf16.mxu0 0
    %223 = vmatpush2.bf16.msra.mxu0 0
    %224 = vmatprep.subr.bf16.mxu0 0
    %225 = vmatpush2.bf16.msra.mxu0 0
    %226 = vmatprep.mubr.bf16.mxu0 0
    %227 = vmatmul.mubr.bf16.gmra.mxu0 %v122
    %v228 = vpop.f32.mrf.mxu0
    %v229 = vadd.f32 %v144, %v228
    %v230 = vpop.f32.mrf.mxu0
    %v231 = vpop.f32.mrf.mxu0
    %v232 = vpop.f32.mrf.mxu0
    %233 = vdwg.mxu0
    %v234 = vlaneseq
    %v235 = vand.u32 %v234, 127
    %vm236 = vcmp.lt.s32.totalorder %v235, 4
    %vm237 = vcmp.eq.s32.totalorder %v235, 4
    %v238 = vsel %vm236, %v229, -inf
    %239 = vmax.xlane.f32.xlu0 %v238
    %v240 = vpop.xlane.xlu0 %239
    %v241 = vsub.f32 %v238, %v240
    %v242 = vmul.f32 %v241, 1.442695
    %v243 = vpow.pop %v242
    %244 = vadd.xlane.f32.xlu0 %v243
    %v245 = vpop.xlane.xlu0 %244
    %v246 = vrcp.pop %v245
    %v247 = vmul.f32 %v243, %v246
    %v248 = vsel %vm237, %v229, 0.0
    %v249 = vsel %vm236, %v247, %v248
    %250 = vst [vmem:[#allocation8] sm:$0xff] %v249
    // Predicated region
    $region34: #{tpu_custom_call.1} parent=1 // pred_check
      _
    $region35: #{tpu_custom_call.1} parent=1 // pred_check_branch
      %252 = sbr.rel (0) target = $region37
    $region36: #{tpu_custom_call.1} parent=1 // pred_region
      %s254 = ssub.s32 128, 128
      %255 = vsyncadd [#allocation4], %s254
      %s257 = sshll.u32 [#allocation8], 4
      %s258 = int_to_ptr.vmem [resolvable:$true] %s257
      %260 = dma.vmem_to_hbm [thread:$0]  %s258, 128, %s5, [#allocation4]
    $region37: #{tpu_custom_call.1} parent=1 // pred_fallthru
      _
    // Predicated region
    $region38: #{tpu_custom_call.1} parent=1 // pred_check
      _
    $region39: #{tpu_custom_call.1} parent=1 // pred_check_branch
      %262 = sbr.rel (0) target = $region41
    $region40: #{tpu_custom_call.1} parent=1 // pred_region
      %263 = dma.done [#allocation4], 128
    $region41: #{tpu_custom_call.1} parent=1 // pred_fallthru
      _
    %264 = vsyncpa [#allocation3], 1
    %265 = vsyncpa [#allocation6], 1
    %266 = vsyncpa [#allocation4], 1

</llo_original>
